<compile_context>
chip_gen: v7x
topology: tpu7x:2x2x1
jax: 0.10.0
libtpu: 0.0.40
codegen_flags: <defaults>
</compile_context>

<pallas_src>
import math
from functools import partial

import jax
import jax.numpy as jnp
from jax.experimental import pallas as pl
from jax.experimental.pallas import tpu as pltpu


def _round_up(x, m):
    return ((x + m - 1) // m) * m


def _pick_tile(padded, unit, max_tile):
    """Largest multiple of `unit` that divides `padded` and is <= max_tile."""
    units = padded // unit
    best = 1
    for d in range(1, units + 1):
        if units % d == 0 and d * unit <= max_tile:
            best = d
    return best * unit


def _tile_config():
    """Per-generation tile maxima and VMEM cap (falls back to v7x-safe)."""
    kind = ""
    try:
        kind = jax.devices()[0].device_kind.lower()
    except Exception:
        pass
    if "v5 lite" in kind or "v5e" in kind or "v5litepod" in kind:
        # 128 MiB VMEM, 4x128^2 MXU: 512^2 output tiles already flip the
        # kernel from HBM-bound to MXU-bound on v5e.
        return dict(tm_max=512, tn_max=512, tk_max=1024,
                    vmem_cap=100 << 20, split_n=False)
    if "v6" in kind:
        # 128 MiB VMEM, 2x256^2 MXU: 1024^2 tiles (~512 flops/byte).
        return dict(tm_max=1024, tn_max=1024, tk_max=1024,
                    vmem_cap=100 << 20, split_n=False)
    # v7x (64 MiB VMEM/TC, 2 TCs) or unknown: same big tiles (~16 MiB/step
    # now that the acc scratch is gone) but keep headroom below 64 MiB and
    # make sure a parallel grid axis has >=2 blocks for the 2 TensorCores.
    return dict(tm_max=1024, tn_max=1024, tk_max=1024,
                vmem_cap=48 << 20, split_n=True)


# --------------------- Pallas kernel: tiled matmul + bias ---------------------
def _linear_kernel(x_ref, w_ref, b_ref, o_ref):
    # x_ref: (tm, tk) bf16 tile of the flattened input
    # w_ref: (tk, tn) bf16 tile of the weight
    # b_ref: (1, tn)  f32 bias row tile
    # o_ref: (tm, tn) f32 output tile; same block for every k -> stays resident
    #        in VMEM and doubles as the accumulator (no scratch needed).
    @pl.when(pl.program_id(2) == 0)
    def _():
        o_ref[...] = jnp.broadcast_to(b_ref[...], o_ref.shape)

    o_ref[...] += jnp.dot(x_ref[...], w_ref[...],
                          preferred_element_type=jnp.float32)


@partial(jax.jit, static_argnames=("n_out", "tm_max", "tn_max", "tk_max",
                                   "vmem_cap", "split_n"))
def _linear_forward(x2d, w_p, b2d, *, n_out, tm_max, tn_max, tk_max,
                    vmem_cap, split_n):
    """x2d: (M, K) f32; w_p: (K_pad, N_pad) bf16; b2d: (1, N_pad) f32."""
    M, K = x2d.shape
    K_pad, N_pad = w_p.shape

    # ---- M: sublane-align small batches (cheap, fused pad); ragged tail for
    #      large M is handled by Pallas partial-block masking. ----------------
    if M <= tm_max:
        M_pad = _round_up(M, 16)
        tm, grid_m = M_pad, 1
    else:
        M_pad = M
        tm = tm_max
        grid_m = pl.cdiv(M, tm)

    # ---- K: full-K block when it fits, else a 128-multiple divisor tile. ----
    if K_pad <= tk_max:
        tk = K_pad
    else:
        tk = _pick_tile(K_pad, 128, tk_max)

    # ---- N: largest 128-multiple divisor of N_pad (lane-dense stores). ------
    n_units = N_pad // 128
    tn = _pick_tile(N_pad, 128, tn_max)
    if split_n and grid_m == 1 and N_pad // tn < 2 and n_units >= 2:
        # v7x: make sure both TensorCores get work on a parallel axis.
        d = max(d for d in range(1, n_units) if n_units % d == 0)
        tn = 128 * d

    # ---- pad + cast activations (fuses with the pallas_call under jit). -----
    x_p = x2d
    if M_pad != M or K_pad != K:
        x_p = jnp.pad(x_p, ((0, M_pad - M), (0, K_pad - K)))
    x_p = x_p.astype(jnp.bfloat16)

    grid = (grid_m, N_pad // tn, K_pad // tk)

    # Per-step VMEM: double-buffered bf16 x/w tiles, f32 bias, f32 output
    # (which is also the accumulator). Leave generous headroom, cap per-device.
    vmem_est = (2 * tm * tk * 2 + 2 * tk * tn * 2 + 2 * tn * 4
                + 2 * tm * tn * 4)
    vmem_limit = int(min(max(vmem_est + (8 << 20), 32 << 20), vmem_cap))

    out = pl.pallas_call(
        _linear_kernel,
        out_shape=jax.ShapeDtypeStruct((M_pad, N_pad), jnp.float32),
        grid_spec=pltpu.PrefetchScalarGridSpec(
            num_scalar_prefetch=0,
            grid=grid,
            in_specs=[
                pl.BlockSpec((tm, tk), lambda i, j, k: (i, k)),
                pl.BlockSpec((tk, tn), lambda i, j, k: (k, j)),
                pl.BlockSpec((1, tn), lambda i, j, k: (0, j)),
            ],
            out_specs=pl.BlockSpec((tm, tn), lambda i, j, k: (i, j)),
        ),
        compiler_params=pltpu.CompilerParams(
            dimension_semantics=("parallel", "parallel", "arbitrary"),
            vmem_limit_bytes=vmem_limit),
    )(x_p, w_p, b2d)

    return out[:M, :n_out]  # slice fuses with the writeback under jit


# ------------------------------- Linear module --------------------------------
class LinearPallas:
    """Forward-pass equivalent of the PyTorch `Linear` module:
    out = input.flatten(start_dim=1) @ weight + bias,
    weight: (input_size, output_size), bias: (output_size,)."""

    def __init__(self, input_size, output_size, init_val=None, key=None):
        self.input_size = input_size
        self.output_size = output_size
        if init_val is not None:
            self.weight = jnp.full((input_size, output_size), init_val,
                                   jnp.float32)
            self.bias = jnp.full((output_size,), init_val, jnp.float32)
        else:
            stdv = 1.0 / math.sqrt(input_size)
            key = jax.random.PRNGKey(42) if key is None else key
            wk, bk = jax.random.split(key)
            self.weight = jax.random.uniform(
                wk, (input_size, output_size), minval=-stdv, maxval=stdv,
                dtype=jnp.float32)
            self.bias = jax.random.uniform(
                bk, (output_size,), minval=-stdv, maxval=stdv,
                dtype=jnp.float32)
        self.grad_weight = jnp.zeros_like(self.weight)
        self.grad_bias = jnp.zeros_like(self.bias)

        self._cfg = _tile_config()
        self._refresh_padded_params()

    def _refresh_padded_params(self):
        """Pad to 128-multiples + cast to bf16 once (hoisted out of forward)."""
        K, N = self.weight.shape
        N_pad = _round_up(N, 128)
        K_pad = K if K <= self._cfg["tk_max"] else _round_up(K, 128)
        w = self.weight
        if K_pad != K or N_pad != N:
            w = jnp.pad(w, ((0, K_pad - K), (0, N_pad - N)))
        self._w_p = w.astype(jnp.bfloat16)
        b = self.bias if N_pad == N else jnp.pad(self.bias, (0, N_pad - N))
        self._b2d = b.reshape(1, N_pad).astype(jnp.float32)

    def set_weight(self, weight):
        self.weight = jnp.asarray(weight, jnp.float32)
        self._refresh_padded_params()

    def set_bias(self, bias):
        self.bias = jnp.asarray(bias, jnp.float32)
        self._refresh_padded_params()

    def forward(self, x):
        x2 = x.reshape(x.shape[0], -1)        # flatten(start_dim=1)
        self.input = x2                       # cached like the torch module
        cfg = self._cfg
        return _linear_forward(
            x2, self._w_p, self._b2d,
            n_out=int(self.weight.shape[1]),
            tm_max=cfg["tm_max"], tn_max=cfg["tn_max"], tk_max=cfg["tk_max"],
            vmem_cap=cfg["vmem_cap"], split_n=cfg["split_n"])

    __call__ = forward

    def param(self):
        # TODO(synk): backward()/grad accumulation is host-side training logic,
        # not part of the forward kernel.
        return [(self.weight, self.grad_weight), (self.bias, self.grad_bias)]


if __name__ == "__main__":
    key = jax.random.PRNGKey(0)
    k1, k2, k3, k4, k5, k6 = jax.random.split(key, 6)

    def _check(y, x2d, lin, shape, atol_bf16=1e-3, atol_f32=5e-2):
        xb = x2d.astype(jnp.bfloat16).astype(jnp.float32)
        wb = lin.weight.astype(jnp.bfloat16).astype(jnp.float32)
        ref_b = xb @ wb + lin.bias
        ref_f = x2d @ lin.weight + lin.bias
        assert y.shape == shape, y.shape
        assert jnp.allclose(y, ref_b, atol=atol_bf16, rtol=atol_bf16), float(
            jnp.max(jnp.abs(y - ref_b)))
        assert jnp.allclose(y, ref_f, atol=atol_f32, rtol=atol_f32), float(
            jnp.max(jnp.abs(y - ref_f)))

    # Case 1: small, exercises flatten(start_dim=1): (2,4,16) -> (2,64) @ (64,32)
    x1 = jax.random.normal(k1, (2, 4, 16), dtype=jnp.float32)
    lin1 = LinearPallas(64, 32, key=k2)
    y1 = jax.block_until_ready(lin1(x1))
    _check(y1, x1.reshape(2, -1), lin1, (2, 32))

    # Case 2: N=200 pads to 256 (divisor-sized tn), full-K block (K=1024).
    x2 = jax.random.normal(k3, (4, 1024), dtype=jnp.float32)
    lin2 = LinearPallas(1024, 200, key=k4)
    y2 = jax.block_until_ready(lin2(x2))
    _check(y2, x2, lin2, (4, 200))

    # Case 3: K=1280 > tk_max -> K tiling (tk=640, two k-steps) + bias fold.
    x3 = jax.random.normal(k5, (8, 1280), dtype=jnp.float32)
    lin3 = LinearPallas(1280, 96, key=k6)
    y3 = jax.block_until_ready(lin3(x3))
    _check(y3, x3, lin3, (8, 96))

    print("KERNEL_OK")
</pallas_src>

<mosaic_0001>
module attributes {stable_mosaic.version = 11 : i64} {
  func.func @_linear_kernel(%arg0: i32, %arg1: i32, %arg2: i32, %arg3: memref<16x64xbf16, #tpu.memory_space<vmem>>, %arg4: memref<64x128xbf16, #tpu.memory_space<vmem>>, %arg5: memref<1x128xf32, #tpu.memory_space<vmem>>, %arg6: memref<16x128xf32, #tpu.memory_space<vmem>>) attributes {dimension_semantics = [#tpu.dimension_semantics<parallel>, #tpu.dimension_semantics<parallel>, #tpu.dimension_semantics<arbitrary>], iteration_bounds = array<i64: 1, 1, 1>, scalar_prefetch = 0 : i64, scratch_operands = 0 : i64, tpu.core_type = #tpu.core_type<tc>, window_params = [{transform_indices = @transform_0, window_bounds = array<i64: 16, 64>}, {transform_indices = @transform_1, window_bounds = array<i64: 64, 128>}, {transform_indices = @transform_2, window_bounds = array<i64: 1, 128>}, {transform_indices = @transform_3, window_bounds = array<i64: 16, 128>}]} {
    %c0_i32 = arith.constant 0 : i32
    %0 = arith.cmpi eq, %arg2, %c0_i32 : i32
    %1 = arith.extui %0 : i1 to i32
    %c0_i32_0 = arith.constant 0 : i32
    %2 = arith.cmpi ne, %1, %c0_i32_0 : i32
    scf.if %2 {
      %c0_8 = arith.constant 0 : index
      %c0_9 = arith.constant 0 : index
      %9 = vector.load %arg5[%c0_8, %c0_9] : memref<1x128xf32, #tpu.memory_space<vmem>>, vector<1x128xf32>
      %10 = vector.shape_cast %9 : vector<1x128xf32> to vector<1x128xf32>
      %11 = vector.broadcast %10 : vector<1x128xf32> to vector<16x128xf32>
      %c0_10 = arith.constant 0 : index
      %c0_11 = arith.constant 0 : index
      %12 = vector.load %arg6[%c0_10, %c0_11] : memref<16x128xf32, #tpu.memory_space<vmem>>, vector<16x128xf32>
      tpu.vector_store %arg6[%c0_10, %c0_11], %11 {strides = array<i32>} : memref<16x128xf32, #tpu.memory_space<vmem>>, vector<16x128xf32>,
    } else {
    }
    %c0 = arith.constant 0 : index
    %c0_1 = arith.constant 0 : index
    %3 = vector.load %arg6[%c0, %c0_1] : memref<16x128xf32, #tpu.memory_space<vmem>>, vector<16x128xf32>
    %c0_2 = arith.constant 0 : index
    %c0_3 = arith.constant 0 : index
    %4 = vector.load %arg3[%c0_2, %c0_3] : memref<16x64xbf16, #tpu.memory_space<vmem>>, vector<16x64xbf16>
    %c0_4 = arith.constant 0 : index
    %c0_5 = arith.constant 0 : index
    %5 = vector.load %arg4[%c0_4, %c0_5] : memref<64x128xbf16, #tpu.memory_space<vmem>>, vector<64x128xbf16>
    %cst = arith.constant dense<0.000000e+00> : vector<16x128xf32>
    %6 = tpu.matmul %4, %5, %cst {dimension_numbers = #tpu.dot_dimension_numbers<[1], [0], [0], [1], [0, 0, 1, 1], [], []>} : vector<16x64xbf16>, vector<64x128xbf16>, vector<16x128xf32> -> vector<16x128xf32>
    %7 = arith.addf %3, %6 : vector<16x128xf32>
    %c0_6 = arith.constant 0 : index
    %c0_7 = arith.constant 0 : index
    %8 = vector.load %arg6[%c0_6, %c0_7] : memref<16x128xf32, #tpu.memory_space<vmem>>, vector<16x128xf32>
    tpu.vector_store %arg6[%c0_6, %c0_7], %7 {strides = array<i32>} : memref<16x128xf32, #tpu.memory_space<vmem>>, vector<16x128xf32>,
    return
  }
  func.func @transform_0(%arg0: i32, %arg1: i32, %arg2: i32) -> (i32, i32) {
    %c0_i32 = arith.constant 0 : i32
    return %arg0, %arg2 : i32, i32
  }
  func.func @transform_1(%arg0: i32, %arg1: i32, %arg2: i32) -> (i32, i32) {
    %c0_i32 = arith.constant 0 : i32
    return %arg2, %arg1 : i32, i32
  }
  func.func @transform_2(%arg0: i32, %arg1: i32, %arg2: i32) -> (i32, i32) {
    %c0_i32 = arith.constant 0 : i32
    %c0_i32_0 = arith.constant 0 : i32
    return %c0_i32, %arg1 : i32, i32
  }
  func.func @transform_3(%arg0: i32, %arg1: i32, %arg2: i32) -> (i32, i32) {
    %c0_i32 = arith.constant 0 : i32
    return %arg0, %arg1 : i32, i32
  }
}

</mosaic_0001>

<llo_original>
// kernel: _linear_forward.1
$region0: #{_linear_forward.1}
  #allocation0 [shape = 'u32[]', space=smem, size = 0x4, offset = 0x4, fixed_abs, tag = 'smem constant byte address 0x4 - core index']
  #allocation1 [shape = 'u32[144,128]{1,0:T(1,128)}', space=vmem, size = 0x12000, scoped, tag = 'internal scratch']
  %s0 = inlined_call_operand.vmem [shape: bf16[16,64], index: 0, kind: input, shape index: {}]
  %s1 = inlined_call_operand.hbm [shape: bf16[64,128], index: 1, kind: input, shape index: {}]
  %s2 = inlined_call_operand.vmem [shape: f32[1,128], index: 2, kind: input, shape index: {}]
  %s3 = inlined_call_operand.vmem [shape: f32[16,128], index: 3, kind: output, shape index: {}]
  %s4 = sld [smem:[#allocation0]]
  $region30: #{_linear_forward.1} parent=0
    _
  %s6 = ssub.s32 1, %s4
  %s7 = scalar_select 0, %s6, %s4
  $region1: #{_linear_forward.1} parent=0
    #allocation2 [shape = 'u8[16384]{0}', space=vmem, size = 0x4000, scoped, tag = 'input window, operand 1, single buffered']
    #allocation3 [shape = 's32[1]{0}', space=sflag, size = 0x4, scoped, tag = 'scoped memory for _linear_forward.1']
    %8 = vsyncpa [#allocation3], 0
    // Predicated region
    $region2: #{_linear_forward.1} parent=1 // pred_check
      _
    $region3: #{_linear_forward.1} parent=1 // pred_check_branch
      %10 = sbr.rel (0) target = $region5
    $region4: #{_linear_forward.1} parent=1 // pred_region
      _
    $region5: #{_linear_forward.1} parent=1 // pred_fallthru
      _
    // Predicated region
    $region6: #{_linear_forward.1} parent=1 // pred_check
      _
    $region7: #{_linear_forward.1} parent=1 // pred_check_branch
      %12 = sbr.rel (0) target = $region9
    $region8: #{_linear_forward.1} parent=1 // pred_region
      %s14 = ssub.s32 512, 512
      %15 = vsyncadd [#allocation3], %s14
      %s16 = sshll.u32 [#allocation2], 4
      %s17 = int_to_ptr.vmem [resolvable:$true] %s16
      %22 = dma.hbm_to_vmem [thread:$0]  %s1, 512, %s17, [#allocation3], 64, 64, 4
    $region9: #{_linear_forward.1} parent=1 // pred_fallthru
      _
    // Predicated region
    $region10: #{_linear_forward.1} parent=1 // pred_check
      _
    $region11: #{_linear_forward.1} parent=1 // pred_check_branch
      %24 = sbr.rel (0) target = $region13
    $region12: #{_linear_forward.1} parent=1 // pred_region
      _
    $region13: #{_linear_forward.1} parent=1 // pred_fallthru
      _
    // Predicated region
    $region14: #{_linear_forward.1} parent=1 // pred_check
      _
    $region15: #{_linear_forward.1} parent=1 // pred_check_branch
      %26 = sbr.rel (0) target = $region17
    $region16: #{_linear_forward.1} parent=1 // pred_region
      %27 = dma.done [#allocation3], 512
    $region17: #{_linear_forward.1} parent=1 // pred_fallthru
      _
    %p29 = scmp.eq.s32.totalorder 0, 0
    // Predicated region
    $region18: #{_linear_forward.1} parent=1 // pred_check
      %p30 = pneg %p29
    $region19: #{_linear_forward.1} parent=1 // pred_check_branch
      %32 = sbr.rel (%p30) target = $region21
    $region20: #{_linear_forward.1} parent=1 // pred_region
      %v33 = vld [vmem:[%s2] sm:$0x1]
      %v35 = vlaneseq
      %v36 = vshrl.u32 %v35, 7
      %v37 = vsub.s32 0, %v36
      %v38 = vrot.slane %v33, %v37
      %40 = vst [vmem:[%s3] sm:$0xff] %v38
      %41 = vst [vmem:[%s3 + $0x8] sm:$0xff] %v38
    $region21: #{_linear_forward.1} parent=1 // pred_fallthru
      _
    %v42 = vld [vmem:[%s3] sm:$0xff]
    %v43 = vld [vmem:[%s3 + $0x8] sm:$0xff]
    %v44 = vld [vmem:[%s0] sm:$0xf]
    %v45 = vld [vmem:[%s0 + $0x4] sm:$0xf]
    %v46 = vld [vmem:[#allocation2] sm:$0xf]
    %v47 = vld [vmem:[#allocation2 + $0x4] sm:$0xf]
    %v48 = vld [vmem:[#allocation2 + $0x8] sm:$0xf]
    %v49 = vld [vmem:[#allocation2 + $0xc] sm:$0xf]
    %v50 = vld [vmem:[#allocation2 + $0x10] sm:$0xf]
    %v51 = vld [vmem:[#allocation2 + $0x14] sm:$0xf]
    %v52 = vld [vmem:[#allocation2 + $0x18] sm:$0xf]
    %v53 = vld [vmem:[#allocation2 + $0x1c] sm:$0xf]
    %v56 = vunpack.c.l.b16 %v44
    %v57 = vunpack.c.l.b16 %v45
    %v58 = vpack.c.b16 %v57, %v56
    %v67 = vunpack.c.l.b16 %v46
    %v68 = vunpack.c.l.b16 %v47
    %v69 = vunpack.c.l.b16 %v48
    %v70 = vunpack.c.l.b16 %v49
    %v71 = vunpack.c.l.b16 %v50
    %v72 = vunpack.c.l.b16 %v51
    %v73 = vunpack.c.l.b16 %v52
    %v74 = vunpack.c.l.b16 %v53
    %v75 = vpack.c.b16 %v68, %v67
    %v76 = vpack.c.b16 %v70, %v69
    %v77 = vpack.c.b16 %v72, %v71
    %v78 = vpack.c.b16 %v74, %v73
    %vm83 = vcmask 523264
    %v85 = vsel %vm83, %v58, 0
    %87 = vmatprep.subr.bf16.mxu0 0
    %88 = vmatpush1.bf16.msra.mxu0 %v75
    %89 = vmatprep.subr.bf16.mxu0 0
    %90 = vmatpush1.bf16.msra.mxu0 %v76
    %91 = vmatprep.subr.bf16.mxu0 0
    %92 = vmatpush1.bf16.msra.mxu0 %v77
    %93 = vmatprep.subr.bf16.mxu0 0
    %94 = vmatpush1.bf16.msra.mxu0 %v78
    %95 = vmatprep.subr.bf16.mxu0 0
    %96 = vmatpush1.bf16.msra.mxu0 0
    %97 = vmatprep.subr.bf16.mxu0 0
    %98 = vmatpush1.bf16.msra.mxu0 0
    %99 = vmatprep.subr.bf16.mxu0 0
    %100 = vmatpush1.bf16.msra.mxu0 0
    %101 = vmatprep.subr.bf16.mxu0 0
    %102 = vmatpush1.bf16.msra.mxu0 0
    %103 = vmatprep.subr.bf16.mxu0 0
    %104 = vmatpush1.bf16.msra.mxu0 0
    %105 = vmatprep.subr.bf16.mxu0 0
    %106 = vmatpush1.bf16.msra.mxu0 0
    %107 = vmatprep.subr.bf16.mxu0 0
    %108 = vmatpush1.bf16.msra.mxu0 0
    %109 = vmatprep.subr.bf16.mxu0 0
    %110 = vmatpush1.bf16.msra.mxu0 0
    %111 = vmatprep.subr.bf16.mxu0 0
    %112 = vmatpush1.bf16.msra.mxu0 0
    %113 = vmatprep.subr.bf16.mxu0 0
    %114 = vmatpush1.bf16.msra.mxu0 0
    %115 = vmatprep.subr.bf16.mxu0 0
    %116 = vmatpush1.bf16.msra.mxu0 0
    %117 = vmatprep.subr.bf16.mxu0 0
    %118 = vmatpush1.bf16.msra.mxu0 0
    %119 = vmatprep.mubr.bf16.mxu0 0
    %120 = vmatmul.mubr.bf16.gmra.mrb[0].mxu0 %v85
    %v121 = vpop.f32.mrb[0].mxu0
    %v122 = vadd.f32 0.0, %v121
    %v123 = vpop.f32.mrb[0].mxu0
    %v124 = vpop.f32.mrb[0].mxu0
    %v125 = vadd.f32 0.0, %v124
    %v126 = vpop.f32.mrb[0].mxu0
    %127 = vdwg.mxu0
    %v128 = vadd.f32 %v42, %v122
    %v129 = vadd.f32 %v43, %v125
    %130 = vst [vmem:[%s3] sm:$0xff] %v128
    %131 = vst [vmem:[%s3 + $0x8] sm:$0xff] %v129
    // Predicated region
    $region22: #{_linear_forward.1} parent=1 // pred_check
      _
    $region23: #{_linear_forward.1} parent=1 // pred_check_branch
      %133 = sbr.rel (0) target = $region25
    $region24: #{_linear_forward.1} parent=1 // pred_region
      _
    $region25: #{_linear_forward.1} parent=1 // pred_fallthru
      _
    // Predicated region
    $region26: #{_linear_forward.1} parent=1 // pred_check
      _
    $region27: #{_linear_forward.1} parent=1 // pred_check_branch
      %135 = sbr.rel (0) target = $region29
    $region28: #{_linear_forward.1} parent=1 // pred_region
      _
    $region29: #{_linear_forward.1} parent=1 // pred_fallthru
      _
    %136 = vsyncpa [#allocation3], 1

</llo_original>
